<compile_context>
chip_gen: v6e
topology: v6e:2x2x1
jax: 0.10.0
libtpu: 0.0.40
codegen_flags: <defaults>
</compile_context>

<pallas_src>
import math

import jax
import jax.numpy as jnp
from jax.experimental import pallas as pl
from jax.experimental.pallas import tpu as pltpu


def _embed_kernel(x_ref, w_ref, b_ref, o_ref):
    # x_ref: (TM, K)  w_ref: (K, N)  b_ref: (1, N)  o_ref: (TM, N)
    acc = jnp.dot(x_ref[...], w_ref[...], preferred_element_type=jnp.float32)
    o_ref[...] = (acc + b_ref[...]).astype(o_ref.dtype)


def _pick_fold(d_model: int, n_rows: int) -> int:
    """Row-fold factor so the kernel's output last dim is a multiple of 128 lanes."""
    if d_model % 128 == 0:
        return 1
    k = 128 // math.gcd(d_model, 128)  # == lcm(d_model, 128) // d_model
    if k <= 16 and n_rows % k == 0:
        return k
    return 1


def input_embeddings(x, weight, bias, d_model, *, block_rows=512):
    """InputEmbeddings forward: (x @ W + b) * sqrt(d_model).

    x:      (B, S, D_in) float32
    weight: (D_in, d_model)  (pre-transposed vs. PyTorch's (d_model, D_in) -- pure glue)
    bias:   (d_model,)
    """
    B, S, D_in = x.shape
    M = B * S
    scale = math.sqrt(d_model)

    # Fold the static sqrt(d_model) scale into the parameters (one-time wrapper work).
    w_s = weight * scale
    b_s = bias * scale

    # Lane-dense output: pack `fold` consecutive rows -> output last dim fold*d_model (>=128).
    fold = _pick_fold(d_model, M)
    Kf = fold * D_in
    Nf = fold * d_model
    Mf = M // fold

    x2d = x.reshape(Mf, Kf)
    if fold > 1:
        w2d = jnp.kron(jnp.eye(fold, dtype=w_s.dtype), w_s)   # (Kf, Nf) block-diagonal
        b2d = jnp.tile(b_s, fold).reshape(1, Nf)
    else:
        w2d = w_s
        b2d = b_s.reshape(1, Nf)

    itemsize = jnp.dtype(x.dtype).itemsize

    def _vmem_need(t):
        # double-buffered x & out tiles + resident weight + bias
        return 2 * t * (Kf + Nf) * itemsize + (Kf * Nf + Nf) * itemsize

    # Row tile: as large as possible for DMA overlap, capped for v7x's smaller VMEM.
    tm = min(block_rows, Mf)
    if tm < Mf:
        tm = max(8, (tm // 8) * 8)
    vmem_budget = 48 * 1024 * 1024
    while tm > 8 and _vmem_need(tm) > vmem_budget:
        tm = max(8, ((tm // 2) // 8) * 8)

    # Pad rows so the grid divides evenly (glue; sliced off after the call).
    M_pad = pl.cdiv(Mf, tm) * tm
    if M_pad != Mf:
        x2d = jnp.pad(x2d, ((0, M_pad - Mf), (0, 0)))

    grid = (M_pad // tm,)

    cost = pl.CostEstimate(
        flops=2 * M * D_in * d_model,
        transcendentals=0,
        bytes_accessed=(M * D_in + D_in * d_model + d_model + M * d_model) * itemsize,
    )

    out2d = pl.pallas_call(
        _embed_kernel,
        out_shape=jax.ShapeDtypeStruct((M_pad, Nf), x.dtype),
        grid_spec=pltpu.PrefetchScalarGridSpec(
            num_scalar_prefetch=0,
            grid=grid,
            in_specs=[
                pl.BlockSpec((tm, Kf), lambda i: (i, 0)),   # x: streamed over rows
                pl.BlockSpec((Kf, Nf), lambda i: (0, 0)),   # weight: VMEM-resident
                pl.BlockSpec((1, Nf), lambda i: (0, 0)),    # bias:   VMEM-resident
            ],
            out_specs=pl.BlockSpec((tm, Nf), lambda i: (i, 0)),
        ),
        compiler_params=pltpu.CompilerParams(
            dimension_semantics=("parallel",),  # independent rows -> both TCs on v7x
            vmem_limit_bytes=int(max(2 * _vmem_need(tm) + (1 << 20), 16 * 1024 * 1024)),
        ),
        cost_estimate=cost,
    )(x2d, w2d, b2d)

    out = out2d[:Mf].reshape(M, d_model)
    return out.reshape(B, S, d_model)


if __name__ == "__main__":
    # Small shapes consistent with the module: batch=2, seq=8, input_dim=4, d_model=32.
    B, S, D_in, D_model = 2, 8, 4, 32

    key = jax.random.PRNGKey(0)
    kx, kw, kb = jax.random.split(key, 3)

    x = jax.random.normal(kx, (B, S, D_in), dtype=jnp.float32)
    # Deterministic parameter init (PyTorch nn.Linear uses uniform(-1/sqrt(D_in), 1/sqrt(D_in)));
    # stored already transposed to (D_in, D_model) for x @ W.
    bound = 1.0 / math.sqrt(D_in)
    weight = jax.random.uniform(kw, (D_in, D_model), dtype=jnp.float32,
                                minval=-bound, maxval=bound)
    bias = jax.random.uniform(kb, (D_model,), dtype=jnp.float32,
                              minval=-bound, maxval=bound)

    out = input_embeddings(x, weight, bias, D_model)
    out = jax.block_until_ready(out)

    # Reference check in plain JAX.
    ref = (x @ weight + bias) * math.sqrt(D_model)
    assert out.shape == (B, S, D_model)
    assert jnp.allclose(out, ref, atol=1e-5, rtol=1e-5)

    print("KERNEL_OK")
</pallas_src>

<mosaic_0001>
module attributes {stable_mosaic.version = 11 : i64} {
  func.func @_embed_kernel(%arg0: i32, %arg1: memref<4x16xf32, #tpu.memory_space<vmem>>, %arg2: memref<16x128xf32, #tpu.memory_space<vmem>>, %arg3: memref<1x128xf32, #tpu.memory_space<vmem>>, %arg4: memref<4x128xf32, #tpu.memory_space<vmem>>) attributes {dimension_semantics = [#tpu.dimension_semantics<parallel>], iteration_bounds = array<i64: 1>, scalar_prefetch = 0 : i64, scratch_operands = 0 : i64, tpu.core_type = #tpu.core_type<tc>, window_params = [{transform_indices = @transform_0, window_bounds = array<i64: 4, 16>}, {pipeline_mode = #tpu.pipeline_mode<synchronous>, transform_indices = @transform_1, window_bounds = array<i64: 16, 128>}, {pipeline_mode = #tpu.pipeline_mode<synchronous>, transform_indices = @transform_2, window_bounds = array<i64: 1, 128>}, {transform_indices = @transform_3, window_bounds = array<i64: 4, 128>}]} {
    %c0 = arith.constant 0 : index
    %c0_0 = arith.constant 0 : index
    %0 = vector.load %arg1[%c0, %c0_0] : memref<4x16xf32, #tpu.memory_space<vmem>>, vector<4x16xf32>
    %c0_1 = arith.constant 0 : index
    %c0_2 = arith.constant 0 : index
    %1 = vector.load %arg2[%c0_1, %c0_2] : memref<16x128xf32, #tpu.memory_space<vmem>>, vector<16x128xf32>
    %cst = arith.constant dense<0.000000e+00> : vector<4x128xf32>
    %2 = tpu.matmul %0, %1, %cst {dimension_numbers = #tpu.dot_dimension_numbers<[1], [0], [0], [1], [0, 0, 1, 1], [], []>} : vector<4x16xf32>, vector<16x128xf32>, vector<4x128xf32> -> vector<4x128xf32>
    %c0_3 = arith.constant 0 : index
    %c0_4 = arith.constant 0 : index
    %3 = vector.load %arg3[%c0_3, %c0_4] : memref<1x128xf32, #tpu.memory_space<vmem>>, vector<1x128xf32>
    %4 = vector.broadcast %3 : vector<1x128xf32> to vector<4x128xf32>
    %5 = arith.addf %2, %4 : vector<4x128xf32>
    %c0_5 = arith.constant 0 : index
    %c0_6 = arith.constant 0 : index
    %6 = vector.load %arg4[%c0_5, %c0_6] : memref<4x128xf32, #tpu.memory_space<vmem>>, vector<4x128xf32>
    tpu.vector_store %arg4[%c0_5, %c0_6], %5 {strides = array<i32>} : memref<4x128xf32, #tpu.memory_space<vmem>>, vector<4x128xf32>,
    return
  }
  func.func @transform_0(%arg0: i32) -> (i32, i32) {
    %c0_i32 = arith.constant 0 : i32
    %c0_i32_0 = arith.constant 0 : i32
    return %arg0, %c0_i32 : i32, i32
  }
  func.func @transform_1(%arg0: i32) -> (i32, i32) {
    %c0_i32 = arith.constant 0 : i32
    %c0_i32_0 = arith.constant 0 : i32
    %c0_i32_1 = arith.constant 0 : i32
    return %c0_i32, %c0_i32_0 : i32, i32
  }
  func.func @transform_2(%arg0: i32) -> (i32, i32) {
    %c0_i32 = arith.constant 0 : i32
    %c0_i32_0 = arith.constant 0 : i32
    %c0_i32_1 = arith.constant 0 : i32
    return %c0_i32, %c0_i32_0 : i32, i32
  }
  func.func @transform_3(%arg0: i32) -> (i32, i32) {
    %c0_i32 = arith.constant 0 : i32
    %c0_i32_0 = arith.constant 0 : i32
    return %arg0, %c0_i32 : i32, i32
  }
}

</mosaic_0001>

<llo_original>
// kernel: tpu_custom_call.1
$region0: #{tpu_custom_call.1}
  #allocation0 [shape = 'u32[]', space=smem, size = 0x4, offset = 0x4, fixed_abs, tag = 'smem constant byte address 0x4 - core index']
  #allocation1 [shape = 'u32[144,128]{1,0:T(1,128)}', space=vmem, size = 0x12000, scoped, tag = 'internal scratch']
  %s0 = inlined_call_operand.hbm [shape: f32[4,16], index: 0, kind: input, shape index: {}]
  %s1 = inlined_call_operand.hbm [shape: f32[16,128], index: 1, kind: input, shape index: {}]
  %s2 = inlined_call_operand.vmem [shape: f32[1,128], index: 2, kind: input, shape index: {}]
  %s3 = inlined_call_operand.hbm [shape: f32[4,128], index: 3, kind: output, shape index: {}]
  %s4 = sld [smem:[#allocation0]]
  $region30: #{tpu_custom_call.1} parent=0
    _
  %s6 = ssub.s32 1, %s4
  %s7 = scalar_select 0, %s6, %s4
  $region1: #{tpu_custom_call.1} parent=0
    #allocation2 [shape = 'u8[2048]{0}', space=vmem, size = 0x800, scoped, tag = 'input window, operand 0, single buffered']
    #allocation3 [shape = 's32[1]{0}', space=sflag, size = 0x4, scoped, tag = 'scoped memory for tpu_custom_call.1']
    #allocation4 [shape = 's32[1]{0}', space=sflag, size = 0x4, scoped, tag = 'scoped memory for tpu_custom_call.1']
    #allocation5 [shape = 'u8[8192]{0}', space=vmem, size = 0x2000, scoped, tag = 'input window, operand 1, single buffered']
    #allocation6 [shape = 's32[1]{0}', space=sflag, size = 0x4, scoped, tag = 'scoped memory for tpu_custom_call.1']
    #allocation7 [shape = 'u8[2048]{0}', space=vmem, size = 0x800, scoped, tag = 'output window, operand 0, single buffered']
    %8 = vsyncpa [#allocation3], 0
    %9 = vsyncpa [#allocation6], 0
    %10 = vsyncpa [#allocation4], 0
    // Predicated region
    $region2: #{tpu_custom_call.1} parent=1 // pred_check
      _
    $region3: #{tpu_custom_call.1} parent=1 // pred_check_branch
      %12 = sbr.rel (0) target = $region5
    $region4: #{tpu_custom_call.1} parent=1 // pred_region
      %s14 = ssub.s32 64, 64
      %15 = vsyncadd [#allocation3], %s14
      %s17 = sshll.u32 [#allocation2], 4
      %s18 = int_to_ptr.vmem [resolvable:$true] %s17
      %20 = dma.hbm_to_vmem [thread:$0]  %s0, 64, %s18, [#allocation3]
    $region5: #{tpu_custom_call.1} parent=1 // pred_fallthru
      _
    // Predicated region
    $region6: #{tpu_custom_call.1} parent=1 // pred_check
      _
    $region7: #{tpu_custom_call.1} parent=1 // pred_check_branch
      %22 = sbr.rel (0) target = $region9
    $region8: #{tpu_custom_call.1} parent=1 // pred_region
      %s24 = ssub.s32 256, 256
      %25 = vsyncadd [#allocation6], %s24
      %s26 = sshll.u32 [#allocation5], 4
      %s27 = int_to_ptr.vmem [resolvable:$true] %s26
      %32 = dma.hbm_to_vmem [thread:$0]  %s1, 256, %s27, [#allocation6], 128, 128, 8
    $region9: #{tpu_custom_call.1} parent=1 // pred_fallthru
      _
    // Predicated region
    $region10: #{tpu_custom_call.1} parent=1 // pred_check
      _
    $region11: #{tpu_custom_call.1} parent=1 // pred_check_branch
      %34 = sbr.rel (0) target = $region13
    $region12: #{tpu_custom_call.1} parent=1 // pred_region
      _
    $region13: #{tpu_custom_call.1} parent=1 // pred_fallthru
      _
    // Predicated region
    $region14: #{tpu_custom_call.1} parent=1 // pred_check
      _
    $region15: #{tpu_custom_call.1} parent=1 // pred_check_branch
      %36 = sbr.rel (0) target = $region17
    $region16: #{tpu_custom_call.1} parent=1 // pred_region
      %37 = dma.done [#allocation3], 64
    $region17: #{tpu_custom_call.1} parent=1 // pred_fallthru
      _
    // Predicated region
    $region18: #{tpu_custom_call.1} parent=1 // pred_check
      _
    $region19: #{tpu_custom_call.1} parent=1 // pred_check_branch
      %39 = sbr.rel (0) target = $region21
    $region20: #{tpu_custom_call.1} parent=1 // pred_region
      %40 = dma.done [#allocation6], 256
    $region21: #{tpu_custom_call.1} parent=1 // pred_fallthru
      _
    %v41 = vld [vmem:[#allocation2] sm:$0xf]
    %v42 = vld [vmem:[#allocation5] sm:$0xff]
    %v43 = vld [vmem:[#allocation5 + $0x8] sm:$0xff]
    %v44 = vld [vmem:[%s2] sm:$0x1]
    %v46 = vlaneseq
    %v47 = vshrl.u32 %v46, 7
    %v48 = vsub.s32 0, %v47
    %v49 = vrot.slane %v44, %v48
    %vm51 = vcmask 130048
    %v53 = vsel %vm51, %v41, 0
    %55 = vmatprep.subr.mxu0 0.0
    %56 = vmatpush1.msra.mxu0 0.0
    %57 = vmatprep.subr.mxu0 0.0
    %58 = vmatpush1.msra.mxu0 0.0
    %59 = vmatprep.subr.mxu0 0.0
    %60 = vmatpush1.msra.mxu0 0.0
    %61 = vmatprep.subr.mxu0 0.0
    %62 = vmatpush1.msra.mxu0 0.0
    %63 = vmatprep.subr.mxu0 0.0
    %64 = vmatpush1.msra.mxu0 0.0
    %65 = vmatprep.subr.mxu0 0.0
    %66 = vmatpush1.msra.mxu0 0.0
    %67 = vmatprep.subr.mxu0 0.0
    %68 = vmatpush1.msra.mxu0 0.0
    %69 = vmatprep.subr.mxu0 0.0
    %70 = vmatpush1.msra.mxu0 0.0
    %71 = vmatprep.subr.mxu0 0.0
    %72 = vmatpush1.msra.mxu0 0.0
    %73 = vmatprep.subr.mxu0 0.0
    %74 = vmatpush1.msra.mxu0 0.0
    %75 = vmatprep.subr.mxu0 0.0
    %76 = vmatpush1.msra.mxu0 0.0
    %77 = vmatprep.subr.mxu0 0.0
    %78 = vmatpush1.msra.mxu0 0.0
    %79 = vmatprep.subr.mxu0 0.0
    %80 = vmatpush1.msra.mxu0 0.0
    %81 = vmatprep.subr.mxu0 0.0
    %82 = vmatpush1.msra.mxu0 0.0
    %83 = vmatprep.subr.mxu0 0.0
    %84 = vmatpush1.msra.mxu0 %v43
    %85 = vmatprep.subr.mxu0 0.0
    %86 = vmatpush1.msra.mxu0 %v42
    %87 = vmatprep.subr.mxu0 0.0
    %88 = vmatpush2.msra.mxu0 0.0
    %89 = vmatprep.subr.mxu0 0.0
    %90 = vmatpush2.msra.mxu0 0.0
    %91 = vmatprep.subr.mxu0 0.0
    %92 = vmatpush2.msra.mxu0 0.0
    %93 = vmatprep.subr.mxu0 0.0
    %94 = vmatpush2.msra.mxu0 0.0
    %95 = vmatprep.subr.mxu0 0.0
    %96 = vmatpush2.msra.mxu0 0.0
    %97 = vmatprep.subr.mxu0 0.0
    %98 = vmatpush2.msra.mxu0 0.0
    %99 = vmatprep.subr.mxu0 0.0
    %100 = vmatpush2.msra.mxu0 0.0
    %101 = vmatprep.subr.mxu0 0.0
    %102 = vmatpush2.msra.mxu0 0.0
    %103 = vmatprep.subr.mxu0 0.0
    %104 = vmatpush2.msra.mxu0 0.0
    %105 = vmatprep.subr.mxu0 0.0
    %106 = vmatpush2.msra.mxu0 0.0
    %107 = vmatprep.subr.mxu0 0.0
    %108 = vmatpush2.msra.mxu0 0.0
    %109 = vmatprep.subr.mxu0 0.0
    %110 = vmatpush2.msra.mxu0 0.0
    %111 = vmatprep.subr.mxu0 0.0
    %112 = vmatpush2.msra.mxu0 0.0
    %113 = vmatprep.subr.mxu0 0.0
    %114 = vmatpush2.msra.mxu0 0.0
    %115 = vmatprep.subr.mxu0 0.0
    %116 = vmatpush2.msra.mxu0 0.0
    %117 = vmatprep.subr.mxu0 0.0
    %118 = vmatpush2.msra.mxu0 0.0
    %119 = vmatprep.mubr.f32.mxu0 0.0
    %120 = vmatmul.mubr.f32.gmra.mxu0 %v53
    %v121 = vpop.f32.mrf.mxu0
    %v122 = vadd.f32 %v49, %v121
    %v123 = vpop.f32.mrf.mxu0
    %124 = vdwg.mxu0
    %125 = vst [vmem:[#allocation7] sm:$0xf] %v122
    // Predicated region
    $region22: #{tpu_custom_call.1} parent=1 // pred_check
      _
    $region23: #{tpu_custom_call.1} parent=1 // pred_check_branch
      %127 = sbr.rel (0) target = $region25
    $region24: #{tpu_custom_call.1} parent=1 // pred_region
      %s129 = ssub.s32 64, 64
      %130 = vsyncadd [#allocation4], %s129
      %s132 = sshll.u32 [#allocation7], 4
      %s133 = int_to_ptr.vmem [resolvable:$true] %s132
      %135 = dma.vmem_to_hbm [thread:$0]  %s133, 64, %s3, [#allocation4]
    $region25: #{tpu_custom_call.1} parent=1 // pred_fallthru
      _
    // Predicated region
    $region26: #{tpu_custom_call.1} parent=1 // pred_check
      _
    $region27: #{tpu_custom_call.1} parent=1 // pred_check_branch
      %137 = sbr.rel (0) target = $region29
    $region28: #{tpu_custom_call.1} parent=1 // pred_region
      %138 = dma.done [#allocation4], 64
    $region29: #{tpu_custom_call.1} parent=1 // pred_fallthru
      _
    %139 = vsyncpa [#allocation3], 1
    %140 = vsyncpa [#allocation6], 1
    %141 = vsyncpa [#allocation4], 1

</llo_original>
